<compile_context>
chip_gen: v6e
topology: v6e:2x2x1
jax: 0.10.0
libtpu: 0.0.40
codegen_flags: <defaults>
</compile_context>

<pallas_src>
import functools
import math

import jax
import jax.numpy as jnp
from jax.experimental import pallas as pl
from jax.experimental.pallas import tpu as pltpu


def _round_up(x: int, m: int) -> int:
    return (x + m - 1) // m * m


_DEFAULT_MAX_TILE = 512            # tokens per grid step (multiple of 8)
_MAX_PREFETCH_TOKENS = 32768       # cap on scalar-prefetched ids per call
_FALLBACK_VMEM_BYTES = 64 * 1024 * 1024


def _vmem_budget_bytes() -> int:
    """Generation-aware VMEM budget: ~3/4 of the chip's VMEM capacity."""
    cap = _FALLBACK_VMEM_BYTES
    try:
        cap = int(pltpu.get_tpu_info().vmem_capacity_bytes)
    except Exception:
        pass
    if cap <= 0:
        cap = _FALLBACK_VMEM_BYTES
    return (cap * 3) // 4


# -----------------------------------------------------------------------------
# Path 1: VMEM-resident table, one-hot matmul gather (small vocab).
# -----------------------------------------------------------------------------
def _onehot_embed_kernel(tok_ref, table_ref, out_ref, *, vocab, scale):
    # tok_ref:   VMEM (T, 1) int32 token ids for this tile
    # table_ref: VMEM (vocab, E) embedding table (constant block -> resident)
    # out_ref:   VMEM (T, E)
    ids = tok_ref[...]                                              # (T, 1)
    tile = ids.shape[0]
    hot = ids == jax.lax.broadcasted_iota(jnp.int32, (tile, vocab), 1)
    hot = hot.astype(table_ref.dtype)                               # (T, vocab)
    # For f32 tables, HIGHEST precision keeps the one-hot matmul equal to a
    # true gather (default precision would round the table to bf16).
    precision = (jax.lax.Precision.HIGHEST
                 if table_ref.dtype == jnp.float32 else None)
    emb = jnp.dot(hot, table_ref[...],
                  preferred_element_type=jnp.float32,
                  precision=precision)
    out_ref[...] = (emb * scale).astype(out_ref.dtype)


def _token_embedding_onehot(flat_tokens, emb_table, *, tile, scale, vmem_limit):
    n_pad = flat_tokens.shape[0]
    vocab, emb_size = emb_table.shape
    tok2d = flat_tokens.reshape(n_pad, 1)
    return pl.pallas_call(
        functools.partial(_onehot_embed_kernel, vocab=vocab, scale=scale),
        out_shape=jax.ShapeDtypeStruct((n_pad, emb_size), emb_table.dtype),
        grid_spec=pltpu.PrefetchScalarGridSpec(
            num_scalar_prefetch=0,
            grid=(n_pad // tile,),
            in_specs=[
                pl.BlockSpec((tile, 1), lambda i: (i, 0)),
                # Constant block index -> table DMA'd once, reused all steps.
                pl.BlockSpec((vocab, emb_size), lambda i: (0, 0)),
            ],
            out_specs=pl.BlockSpec((tile, emb_size), lambda i: (i, 0)),
        ),
        compiler_params=pltpu.CompilerParams(
            dimension_semantics=("parallel",),
            vmem_limit_bytes=vmem_limit,
        ),
    )(tok2d, emb_table)


# -----------------------------------------------------------------------------
# Path 2: table in HBM, cross-step double-buffered DMA row gather.
# -----------------------------------------------------------------------------
def _dma_gather_embed_kernel(tok_ref, table_ref, out_ref, rows_ref, sem_ref,
                             *, tile, scale):
    # tok_ref:   SMEM (n_chunk,) int32 token ids (scalar prefetch)
    # table_ref: HBM (vocab, E) embedding table (memory_space=pl.ANY)
    # out_ref:   VMEM (tile, E) output block for this step
    # rows_ref:  VMEM (2*tile, E) double-buffered gather landing zone
    # sem_ref:   (2,) shared DMA semaphores, one per slot
    step = pl.program_id(0)
    nsteps = pl.num_programs(0)
    slot = step % 2

    def issue_tile(tile_idx, slot_idx):
        dst_base = slot_idx * tile

        def body(t, carry):
            row = tok_ref[tile_idx * tile + t]
            pltpu.make_async_copy(
                table_ref.at[pl.ds(row, 1), :],
                rows_ref.at[pl.ds(dst_base + t, 1), :],
                sem_ref.at[slot_idx],
            ).start()
            return carry

        jax.lax.fori_loop(0, tile, body, 0, unroll=8)

    # Prime the pipeline with the first tile's rows.
    @pl.when(step == 0)
    def _():
        issue_tile(0, 0)

    # Prefetch the next tile's rows into the other slot before waiting on /
    # consuming the current one (hides random-row HBM latency across steps).
    @pl.when(step + 1 < nsteps)
    def _():
        issue_tile(step + 1, 1 - slot)

    cur = pl.multiple_of(slot * tile, 8)
    cur_view = rows_ref.at[pl.ds(cur, tile), :]
    # All `tile` row copies for this slot signal the same DMA semaphore; one
    # descriptor covering the whole (tile, E) landing zone waits for the
    # aggregate byte count (src == dst wait-only idiom).
    pltpu.make_async_copy(cur_view, cur_view, sem_ref.at[slot]).wait()

    rows = rows_ref[pl.ds(cur, tile), :]
    out_ref[...] = (rows.astype(jnp.float32) * scale).astype(out_ref.dtype)


def _token_embedding_dma_gather(flat_tokens, emb_table, *, tile, scale,
                                vmem_limit):
    n_pad = flat_tokens.shape[0]
    vocab, emb_size = emb_table.shape
    return pl.pallas_call(
        functools.partial(_dma_gather_embed_kernel, tile=tile, scale=scale),
        out_shape=jax.ShapeDtypeStruct((n_pad, emb_size), emb_table.dtype),
        grid_spec=pltpu.PrefetchScalarGridSpec(
            num_scalar_prefetch=1,
            grid=(n_pad // tile,),
            in_specs=[pl.BlockSpec(memory_space=pl.ANY)],
            out_specs=pl.BlockSpec((tile, emb_size), lambda i, tok: (i, 0)),
            scratch_shapes=[
                pltpu.VMEM((2 * tile, emb_size), emb_table.dtype),
                pltpu.SemaphoreType.DMA((2,)),
            ],
        ),
        compiler_params=pltpu.CompilerParams(
            # Cross-step dependence (prefetch of tile i+1 at step i) -> serial.
            dimension_semantics=("arbitrary",),
            vmem_limit_bytes=vmem_limit,
        ),
    )(flat_tokens, emb_table)


# -----------------------------------------------------------------------------
# Public wrapper (same semantics as TokenEmbedding.forward).
# -----------------------------------------------------------------------------
def token_embedding(tokens, emb_table, *, max_tile=_DEFAULT_MAX_TILE):
    """Pallas equivalent of TokenEmbedding.forward: emb_table[tokens]*sqrt(E)."""
    vocab, emb_size = emb_table.shape
    orig_shape = tokens.shape
    scale = math.sqrt(emb_size)

    flat = tokens.reshape(-1).astype(jnp.int32)
    # torch.nn.Embedding raises on out-of-range ids; we clamp instead of
    # risking an out-of-bounds DMA (documented deviation).
    flat = jnp.clip(flat, 0, vocab - 1)
    n_tokens = flat.shape[0]

    max_tile = max(8, _round_up(int(max_tile), 8))
    tile = min(max_tile, _round_up(n_tokens, 8))
    n_pad = _round_up(n_tokens, tile)
    if n_pad != n_tokens:
        flat = jnp.pad(flat, (0, n_pad - n_tokens))

    itemsize = emb_table.dtype.itemsize
    table_bytes = vocab * emb_size * itemsize
    out_tile_bytes = tile * emb_size * itemsize
    budget = _vmem_budget_bytes()
    slack = 2 * 1024 * 1024

    # f32 tables pay multi-pass MXU cost under HIGHEST precision -> lower the
    # one-hot cutoff; bf16 tables run at full MXU rate.
    onehot_vocab_max = 2048 if emb_table.dtype == jnp.bfloat16 else 1024
    onehot_needed = (2 * table_bytes            # double-buffered resident table
                     + 2 * out_tile_bytes       # double-buffered output block
                     + 2 * tile * 4             # token id block
                     + tile * vocab * itemsize  # one-hot intermediate
                     + tile * emb_size * 4      # f32 matmul result
                     + slack)
    use_onehot = (vocab <= onehot_vocab_max) and (onehot_needed <= budget)

    if use_onehot:
        vmem_limit = min(max(onehot_needed, 32 * 1024 * 1024), budget)
        out_flat = _token_embedding_onehot(
            flat, emb_table, tile=tile, scale=scale, vmem_limit=vmem_limit)
    else:
        gather_needed = 4 * out_tile_bytes + slack
        vmem_limit = min(max(gather_needed, 32 * 1024 * 1024), budget)
        # Chunk so each call's scalar-prefetched id array stays small in SMEM.
        chunk = max(tile, (_MAX_PREFETCH_TOKENS // tile) * tile)
        parts = []
        for start in range(0, n_pad, chunk):
            parts.append(_token_embedding_dma_gather(
                flat[start:start + chunk], emb_table,
                tile=tile, scale=scale, vmem_limit=vmem_limit))
        out_flat = parts[0] if len(parts) == 1 else jnp.concatenate(parts, 0)

    return out_flat[:n_tokens].reshape(*orig_shape, emb_size)


if __name__ == "__main__":
    key = jax.random.PRNGKey(0)
    k_emb, k_tok, k_emb2, k_tok2 = jax.random.split(key, 4)

    emb_size = 128
    batch, seq = 2, 8

    # --- Test 1: small vocab -> VMEM-resident one-hot/MXU path (single tile).
    vocab = 64
    table = jax.random.normal(k_emb, (vocab, emb_size), dtype=jnp.float32)
    tokens = jax.random.randint(k_tok, (batch, seq), 0, vocab, dtype=jnp.int32)
    out = jax.block_until_ready(token_embedding(tokens, table))
    ref = table[tokens] * math.sqrt(emb_size)
    assert out.shape == (batch, seq, emb_size)
    assert out.dtype == table.dtype
    assert jnp.allclose(out, ref, rtol=1e-4, atol=1e-3)

    # --- Test 2: one-hot path with multiple grid steps (tile < n_tokens).
    tokens2 = jax.random.randint(k_tok2, (4, 16), 0, vocab, dtype=jnp.int32)
    out2 = jax.block_until_ready(token_embedding(tokens2, table, max_tile=16))
    ref2 = table[tokens2] * math.sqrt(emb_size)
    assert jnp.allclose(out2, ref2, rtol=1e-4, atol=1e-3)

    # --- Test 3: large vocab -> HBM DMA row-gather path, multiple grid steps
    # (exercises cross-step double buffering + the aggregate semaphore wait).
    vocab3 = 4096
    table3 = jax.random.normal(k_emb2, (vocab3, emb_size), dtype=jnp.float32)
    tokens3 = jax.random.randint(k_tok, (2, 16), 0, vocab3, dtype=jnp.int32)
    out3 = jax.block_until_ready(token_embedding(tokens3, table3, max_tile=8))
    ref3 = table3[tokens3] * math.sqrt(emb_size)
    assert out3.shape == (2, 16, emb_size)
    assert jnp.allclose(out3, ref3, rtol=1e-4, atol=1e-3)

    print("KERNEL_OK")
</pallas_src>

<mosaic_0001>
module attributes {stable_mosaic.version = 11 : i64} {
  func.func @_onehot_embed_kernel(%arg0: i32, %arg1: memref<16x1xi32, #tpu.memory_space<vmem>>, %arg2: memref<64x128xf32, #tpu.memory_space<vmem>>, %arg3: memref<16x128xf32, #tpu.memory_space<vmem>>) attributes {dimension_semantics = [#tpu.dimension_semantics<parallel>], iteration_bounds = array<i64: 1>, scalar_prefetch = 0 : i64, scratch_operands = 0 : i64, tpu.core_type = #tpu.core_type<tc>, window_params = [{transform_indices = @transform_0, window_bounds = array<i64: 16, 1>}, {pipeline_mode = #tpu.pipeline_mode<synchronous>, transform_indices = @transform_1, window_bounds = array<i64: 64, 128>}, {transform_indices = @transform_2, window_bounds = array<i64: 16, 128>}]} {
    %c0 = arith.constant 0 : index
    %c0_0 = arith.constant 0 : index
    %0 = vector.load %arg1[%c0, %c0_0] : memref<16x1xi32, #tpu.memory_space<vmem>>, vector<16x1xi32>
    %1 = tpu.iota {dimensions = array<i32: 1>} : vector<16x64xi32>
    %2 = vector.broadcast %0 : vector<16x1xi32> to vector<16x64xi32>
    %3 = arith.cmpi eq, %2, %1 : vector<16x64xi32>
    %4 = arith.extui %3 : vector<16x64xi1> to vector<16x64xi32>
    %5 = arith.sitofp %4 : vector<16x64xi32> to vector<16x64xf32>
    %c0_1 = arith.constant 0 : index
    %c0_2 = arith.constant 0 : index
    %6 = vector.load %arg2[%c0_1, %c0_2] : memref<64x128xf32, #tpu.memory_space<vmem>>, vector<64x128xf32>
    %cst = arith.constant dense<0.000000e+00> : vector<16x128xf32>
    %7 = tpu.matmul %5, %6, %cst {dimension_numbers = #tpu.dot_dimension_numbers<[1], [0], [0], [1], [0, 0, 1, 1], [], []>, precision = #tpu.contract_precision<fp32>} : vector<16x64xf32>, vector<64x128xf32>, vector<16x128xf32> -> vector<16x128xf32>
    %cst_3 = arith.constant 11.3137083 : f32
    %8 = vector.broadcast %cst_3 : f32 to vector<16x128xf32>
    %9 = arith.mulf %7, %8 : vector<16x128xf32>
    %c0_4 = arith.constant 0 : index
    %c0_5 = arith.constant 0 : index
    %10 = vector.load %arg3[%c0_4, %c0_5] : memref<16x128xf32, #tpu.memory_space<vmem>>, vector<16x128xf32>
    tpu.vector_store %arg3[%c0_4, %c0_5], %9 {strides = array<i32>} : memref<16x128xf32, #tpu.memory_space<vmem>>, vector<16x128xf32>,
    return
  }
  func.func @transform_0(%arg0: i32) -> (i32, i32) {
    %c0_i32 = arith.constant 0 : i32
    %c0_i32_0 = arith.constant 0 : i32
    return %arg0, %c0_i32 : i32, i32
  }
  func.func @transform_1(%arg0: i32) -> (i32, i32) {
    %c0_i32 = arith.constant 0 : i32
    %c0_i32_0 = arith.constant 0 : i32
    %c0_i32_1 = arith.constant 0 : i32
    return %c0_i32, %c0_i32_0 : i32, i32
  }
  func.func @transform_2(%arg0: i32) -> (i32, i32) {
    %c0_i32 = arith.constant 0 : i32
    %c0_i32_0 = arith.constant 0 : i32
    return %arg0, %c0_i32 : i32, i32
  }
}

</mosaic_0001>

<llo_original>
// kernel: tpu_custom_call.1
$region0: #{tpu_custom_call.1}
  #allocation0 [shape = 'u32[]', space=smem, size = 0x4, offset = 0x4, fixed_abs, tag = 'smem constant byte address 0x4 - core index']
  #allocation1 [shape = 'u32[144,128]{1,0:T(1,128)}', space=vmem, size = 0x12000, scoped, tag = 'internal scratch']
  %s0 = inlined_call_operand.vmem [shape: s32[16,1], index: 0, kind: input, shape index: {}]
  %s1 = inlined_call_operand.hbm [shape: f32[64,128], index: 1, kind: input, shape index: {}]
  %s2 = inlined_call_operand.hbm [shape: f32[16,128], index: 2, kind: output, shape index: {}]
  %s3 = sld [smem:[#allocation0]]
  $region22: #{tpu_custom_call.1} parent=0
    _
  %s5 = ssub.s32 1, %s3
  %s6 = scalar_select 0, %s5, %s3
  $region1: #{tpu_custom_call.1} parent=0
    #allocation2 [shape = 'u8[32768]{0}', space=vmem, size = 0x8000, scoped, tag = 'input window, operand 1, single buffered']
    #allocation3 [shape = 's32[1]{0}', space=sflag, size = 0x4, scoped, tag = 'scoped memory for tpu_custom_call.1']
    #allocation4 [shape = 's32[1]{0}', space=sflag, size = 0x4, scoped, tag = 'scoped memory for tpu_custom_call.1']
    #allocation5 [shape = 'u8[8192]{0}', space=vmem, size = 0x2000, scoped, tag = 'output window, operand 0, single buffered']
    %7 = vsyncpa [#allocation3], 0
    %8 = vsyncpa [#allocation4], 0
    // Predicated region
    $region2: #{tpu_custom_call.1} parent=1 // pred_check
      _
    $region3: #{tpu_custom_call.1} parent=1 // pred_check_branch
      %10 = sbr.rel (0) target = $region5
    $region4: #{tpu_custom_call.1} parent=1 // pred_region
      _
    $region5: #{tpu_custom_call.1} parent=1 // pred_fallthru
      _
    // Predicated region
    $region6: #{tpu_custom_call.1} parent=1 // pred_check
      _
    $region7: #{tpu_custom_call.1} parent=1 // pred_check_branch
      %12 = sbr.rel (0) target = $region9
    $region8: #{tpu_custom_call.1} parent=1 // pred_region
      %s14 = ssub.s32 1024, 1024
      %15 = vsyncadd [#allocation3], %s14
      %s16 = sshll.u32 [#allocation2], 4
      %s17 = int_to_ptr.vmem [resolvable:$true] %s16
      %22 = dma.hbm_to_vmem [thread:$0]  %s1, 1024, %s17, [#allocation3], 128, 128, 8
    $region9: #{tpu_custom_call.1} parent=1 // pred_fallthru
      _
    // Predicated region
    $region10: #{tpu_custom_call.1} parent=1 // pred_check
      _
    $region11: #{tpu_custom_call.1} parent=1 // pred_check_branch
      %24 = sbr.rel (0) target = $region13
    $region12: #{tpu_custom_call.1} parent=1 // pred_region
      %25 = dma.done [#allocation3], 1024
    $region13: #{tpu_custom_call.1} parent=1 // pred_fallthru
      _
    %v26 = vld [vmem:[%s0] sm:$0xff]
    %v27 = vld [vmem:[%s0 + $0x8] sm:$0xff]
    %v28 = vlaneseq
    %v29 = vand.u32 %v28, 127
    %30 = vset.pattern.permute.xlu0 0
    %31 = vperm.xlu0 %30, %v26
    %v32 = vpop.permute.xlu0 %31
    %33 = vset.pattern.permute.xlu0 0
    %34 = vperm.xlu0 %33, %v27
    %v35 = vpop.permute.xlu0 %34
    %vm36 = vcmp.eq.s32.totalorder %v32, %v29
    %vm37 = vcmp.eq.s32.totalorder %v35, %v29
    %v38 = vsel %vm36, 1, 0
    %v39 = vsel %vm37, 1, 0
    %v40 = vcvt.s32.f32 %v38
    %v41 = vcvt.s32.f32 %v39
    %v42 = vld [vmem:[#allocation2] sm:$0xff]
    %v43 = vld [vmem:[#allocation2 + $0x8] sm:$0xff]
    %v44 = vld [vmem:[#allocation2 + $0x10] sm:$0xff]
    %v45 = vld [vmem:[#allocation2 + $0x18] sm:$0xff]
    %v46 = vld [vmem:[#allocation2 + $0x20] sm:$0xff]
    %v47 = vld [vmem:[#allocation2 + $0x28] sm:$0xff]
    %v48 = vld [vmem:[#allocation2 + $0x30] sm:$0xff]
    %v49 = vld [vmem:[#allocation2 + $0x38] sm:$0xff]
    %vm50 = vcmask 523264
    %v52 = vsel %vm50, %v40, 0
    %v55 = vsel %vm50, %v41, 0
    %57 = vmatprep.subr.mxu0 0.0
    %58 = vmatpush1.msra.mxu0 0.0
    %59 = vmatprep.subr.mxu0 0.0
    %60 = vmatpush1.msra.mxu0 0.0
    %61 = vmatprep.subr.mxu0 0.0
    %62 = vmatpush1.msra.mxu0 0.0
    %63 = vmatprep.subr.mxu0 0.0
    %64 = vmatpush1.msra.mxu0 0.0
    %65 = vmatprep.subr.mxu0 0.0
    %66 = vmatpush1.msra.mxu0 0.0
    %67 = vmatprep.subr.mxu0 0.0
    %68 = vmatpush1.msra.mxu0 0.0
    %69 = vmatprep.subr.mxu0 0.0
    %70 = vmatpush1.msra.mxu0 0.0
    %71 = vmatprep.subr.mxu0 0.0
    %72 = vmatpush1.msra.mxu0 0.0
    %73 = vmatprep.subr.mxu0 0.0
    %v74 = vand.u32 %v49, 4294901760
    %75 = vmatpush1.msra.mxu0 %v74
    %76 = vmatprep.subr.mxu0 0.0
    %v77 = vand.u32 %v48, 4294901760
    %78 = vmatpush1.msra.mxu0 %v77
    %79 = vmatprep.subr.mxu0 0.0
    %v80 = vand.u32 %v47, 4294901760
    %81 = vmatpush1.msra.mxu0 %v80
    %82 = vmatprep.subr.mxu0 0.0
    %v83 = vand.u32 %v46, 4294901760
    %84 = vmatpush1.msra.mxu0 %v83
    %85 = vmatprep.subr.mxu0 0.0
    %v86 = vand.u32 %v45, 4294901760
    %87 = vmatpush1.msra.mxu0 %v86
    %88 = vmatprep.subr.mxu0 0.0
    %v89 = vand.u32 %v44, 4294901760
    %90 = vmatpush1.msra.mxu0 %v89
    %91 = vmatprep.subr.mxu0 0.0
    %v92 = vand.u32 %v43, 4294901760
    %93 = vmatpush1.msra.mxu0 %v92
    %94 = vmatprep.subr.mxu0 0.0
    %v95 = vand.u32 %v42, 4294901760
    %96 = vmatpush1.msra.mxu0 %v95
    %97 = vmatprep.subr.mxu0 0.0
    %98 = vmatpush2.msra.mxu0 0.0
    %99 = vmatprep.subr.mxu0 0.0
    %100 = vmatpush2.msra.mxu0 0.0
    %101 = vmatprep.subr.mxu0 0.0
    %102 = vmatpush2.msra.mxu0 0.0
    %103 = vmatprep.subr.mxu0 0.0
    %104 = vmatpush2.msra.mxu0 0.0
    %105 = vmatprep.subr.mxu0 0.0
    %106 = vmatpush2.msra.mxu0 0.0
    %107 = vmatprep.subr.mxu0 0.0
    %108 = vmatpush2.msra.mxu0 0.0
    %109 = vmatprep.subr.mxu0 0.0
    %110 = vmatpush2.msra.mxu0 0.0
    %111 = vmatprep.subr.mxu0 0.0
    %112 = vmatpush2.msra.mxu0 0.0
    %113 = vmatprep.subr.mxu0 0.0
    %114 = vmatpush2.msra.mxu0 0.0
    %115 = vmatprep.subr.mxu0 0.0
    %116 = vmatpush2.msra.mxu0 0.0
    %117 = vmatprep.subr.mxu0 0.0
    %118 = vmatpush2.msra.mxu0 0.0
    %119 = vmatprep.subr.mxu0 0.0
    %120 = vmatpush2.msra.mxu0 0.0
    %121 = vmatprep.subr.mxu0 0.0
    %122 = vmatpush2.msra.mxu0 0.0
    %123 = vmatprep.subr.mxu0 0.0
    %124 = vmatpush2.msra.mxu0 0.0
    %125 = vmatprep.subr.mxu0 0.0
    %126 = vmatpush2.msra.mxu0 0.0
    %127 = vmatprep.subr.mxu0 0.0
    %128 = vmatpush2.msra.mxu0 0.0
    %129 = vmatprep.mubr.f32.mxu0 0.0
    %v130 = vand.u32 %v52, 4294901760
    %v131 = vsub.f32 %v52, %v130
    %v132 = vand.u32 %v131, 4294901760
    %v133 = vsub.f32 %v131, %v132
    %v134 = vand.u32 %v133, 4294901760
    %135 = vmatmul.mubr.f32.gmra.mxu0 %v134
    %v136 = vpop.f32.mrf.mxu0
    %v137 = vadd.f32 0.0, %v136
    %v138 = vpop.f32.mrf.mxu0
    %139 = vmatprep.mubr.f32.mxu0 0.0
    %v140 = vand.u32 %v55, 4294901760
    %v141 = vsub.f32 %v55, %v140
    %v142 = vand.u32 %v141, 4294901760
    %v143 = vsub.f32 %v141, %v142
    %v144 = vand.u32 %v143, 4294901760
    %145 = vmatmul.mubr.f32.gmra.mxu0 %v144
    %v146 = vpop.f32.mrf.mxu0
    %v147 = vadd.f32 0.0, %v146
    %v148 = vpop.f32.mrf.mxu0
    %149 = vdwg.mxu0
    %150 = vmatprep.subr.mxu0 0.0
    %151 = vmatpush1.msra.mxu0 0.0
    %152 = vmatprep.subr.mxu0 0.0
    %153 = vmatpush1.msra.mxu0 0.0
    %154 = vmatprep.subr.mxu0 0.0
    %155 = vmatpush1.msra.mxu0 0.0
    %156 = vmatprep.subr.mxu0 0.0
    %157 = vmatpush1.msra.mxu0 0.0
    %158 = vmatprep.subr.mxu0 0.0
    %159 = vmatpush1.msra.mxu0 0.0
    %160 = vmatprep.subr.mxu0 0.0
    %161 = vmatpush1.msra.mxu0 0.0
    %162 = vmatprep.subr.mxu0 0.0
    %163 = vmatpush1.msra.mxu0 0.0
    %164 = vmatprep.subr.mxu0 0.0
    %165 = vmatpush1.msra.mxu0 0.0
    %166 = vmatprep.subr.mxu0 0.0
    %v167 = vand.u32 %v49, 4294901760
    %v168 = vsub.f32 %v49, %v167
    %v169 = vand.u32 %v168, 4294901760
    %v170 = vsub.f32 %v168, %v169
    %v171 = vand.u32 %v170, 4294901760
    %172 = vmatpush1.msra.mxu0 %v171
    %173 = vmatprep.subr.mxu0 0.0
    %v174 = vand.u32 %v48, 4294901760
    %v175 = vsub.f32 %v48, %v174
    %v176 = vand.u32 %v175, 4294901760
    %v177 = vsub.f32 %v175, %v176
    %v178 = vand.u32 %v177, 4294901760
    %179 = vmatpush1.msra.mxu0 %v178
    %180 = vmatprep.subr.mxu0 0.0
    %v181 = vand.u32 %v47, 4294901760
    %v182 = vsub.f32 %v47, %v181
    %v183 = vand.u32 %v182, 4294901760
    %v184 = vsub.f32 %v182, %v183
    %v185 = vand.u32 %v184, 4294901760
    %186 = vmatpush1.msra.mxu0 %v185
    %187 = vmatprep.subr.mxu0 0.0
    %v188 = vand.u32 %v46, 4294901760
    %v189 = vsub.f32 %v46, %v188
    %v190 = vand.u32 %v189, 4294901760
    %v191 = vsub.f32 %v189, %v190
    %v192 = vand.u32 %v191, 4294901760
    %193 = vmatpush1.msra.mxu0 %v192
    %194 = vmatprep.subr.mxu0 0.0
    %v195 = vand.u32 %v45, 4294901760
    %v196 = vsub.f32 %v45, %v195
    %v197 = vand.u32 %v196, 4294901760
    %v198 = vsub.f32 %v196, %v197
    %v199 = vand.u32 %v198, 4294901760
    %200 = vmatpush1.msra.mxu0 %v199
    %201 = vmatprep.subr.mxu0 0.0
    %v202 = vand.u32 %v44, 4294901760
    %v203 = vsub.f32 %v44, %v202
    %v204 = vand.u32 %v203, 4294901760
    %v205 = vsub.f32 %v203, %v204
    %v206 = vand.u32 %v205, 4294901760
    %207 = vmatpush1.msra.mxu0 %v206
    %208 = vmatprep.subr.mxu0 0.0
    %v209 = vand.u32 %v43, 4294901760
    %v210 = vsub.f32 %v43, %v209
    %v211 = vand.u32 %v210, 4294901760
    %v212 = vsub.f32 %v210, %v211
    %v213 = vand.u32 %v212, 4294901760
    %214 = vmatpush1.msra.mxu0 %v213
    %215 = vmatprep.subr.mxu0 0.0
    %v216 = vand.u32 %v42, 4294901760
    %v217 = vsub.f32 %v42, %v216
    %v218 = vand.u32 %v217, 4294901760
    %v219 = vsub.f32 %v217, %v218
    %v220 = vand.u32 %v219, 4294901760
    %221 = vmatpush1.msra.mxu0 %v220
    %222 = vmatprep.subr.mxu0 0.0
    %223 = vmatpush2.msra.mxu0 0.0
    %224 = vmatprep.subr.mxu0 0.0
    %225 = vmatpush2.msra.mxu0 0.0
    %226 = vmatprep.subr.mxu0 0.0
    %227 = vmatpush2.msra.mxu0 0.0
    %228 = vmatprep.subr.mxu0 0.0
    %229 = vmatpush2.msra.mxu0 0.0
    %230 = vmatprep.subr.mxu0 0.0
    %231 = vmatpush2.msra.mxu0 0.0
    %232 = vmatprep.subr.mxu0 0.0
    %233 = vmatpush2.msra.mxu0 0.0
    %234 = vmatprep.subr.mxu0 0.0
    %235 = vmatpush2.msra.mxu0 0.0
    %236 = vmatprep.subr.mxu0 0.0
    %237 = vmatpush2.msra.mxu0 0.0
    %238 = vmatprep.subr.mxu0 0.0
    %239 = vmatpush2.msra.mxu0 0.0
    %240 = vmatprep.subr.mxu0 0.0
    %241 = vmatpush2.msra.mxu0 0.0
    %242 = vmatprep.subr.mxu0 0.0
    %243 = vmatpush2.msra.mxu0 0.0
    %244 = vmatprep.subr.mxu0 0.0
    %245 = vmatpush2.msra.mxu0 0.0
    %246 = vmatprep.subr.mxu0 0.0
    %247 = vmatpush2.msra.mxu0 0.0
    %248 = vmatprep.subr.mxu0 0.0
    %249 = vmatpush2.msra.mxu0 0.0
    %250 = vmatprep.subr.mxu0 0.0
    %251 = vmatpush2.msra.mxu0 0.0
    %252 = vmatprep.subr.mxu0 0.0
    %253 = vmatpush2.msra.mxu0 0.0
    %254 = vmatprep.mubr.f32.mxu0 0.0
    %v255 = vand.u32 %v52, 4294901760
    %256 = vmatmul.mubr.f32.gmra.mxu0 %v255
    %v257 = vpop.f32.mrf.mxu0
    %v258 = vadd.f32 %v137, %v257
    %v259 = vpop.f32.mrf.mxu0
    %260 = vmatprep.mubr.f32.mxu0 0.0
    %v261 = vand.u32 %v55, 4294901760
    %262 = vmatmul.mubr.f32.gmra.mxu0 %v261
    %v263 = vpop.f32.mrf.mxu0
    %v264 = vadd.f32 %v147, %v263
    %v265 = vpop.f32.mrf.mxu0
    %266 = vdwg.mxu0
    %267 = vmatprep.subr.mxu0 0.0
    %268 = vmatpush1.msra.mxu0 0.0
    %269 = vmatprep.subr.mxu0 0.0
    %270 = vmatpush1.msra.mxu0 0.0
    %271 = vmatprep.subr.mxu0 0.0
    %272 = vmatpush1.msra.mxu0 0.0
    %273 = vmatprep.subr.mxu0 0.0
    %274 = vmatpush1.msra.mxu0 0.0
    %275 = vmatprep.subr.mxu0 0.0
    %276 = vmatpush1.msra.mxu0 0.0
    %277 = vmatprep.subr.mxu0 0.0
    %278 = vmatpush1.msra.mxu0 0.0
    %279 = vmatprep.subr.mxu0 0.0
    %280 = vmatpush1.msra.mxu0 0.0
    %281 = vmatprep.subr.mxu0 0.0
    %282 = vmatpush1.msra.mxu0 0.0
    %283 = vmatprep.subr.mxu0 0.0
    %v284 = vand.u32 %v49, 4294901760
    %v285 = vsub.f32 %v49, %v284
    %286 = vmatpush1.msra.mxu0 %v285
    %287 = vmatprep.subr.mxu0 0.0
    %v288 = vand.u32 %v48, 4294901760
    %v289 = vsub.f32 %v48, %v288
    %290 = vmatpush1.msra.mxu0 %v289
    %291 = vmatprep.subr.mxu0 0.0
    %v292 = vand.u32 %v47, 4294901760
    %v293 = vsub.f32 %v47, %v292
    %294 = vmatpush1.msra.mxu0 %v293
    %295 = vmatprep.subr.mxu0 0.0
    %v296 = vand.u32 %v46, 4294901760
    %v297 = vsub.f32 %v46, %v296
    %298 = vmatpush1.msra.mxu0 %v297
    %299 = vmatprep.subr.mxu0 0.0
    %v300 = vand.u32 %v45, 4294901760
    %v301 = vsub.f32 %v45, %v300
    %302 = vmatpush1.msra.mxu0 %v301
    %303 = vmatprep.subr.mxu0 0.0
    %v304 = vand.u32 %v44, 4294901760
    %v305 = vsub.f32 %v44, %v304
    %306 = vmatpush1.msra.mxu0 %v305
    %307 = vmatprep.subr.mxu0 0.0
    %v308 = vand.u32 %v43, 4294901760
    %v309 = vsub.f32 %v43, %v308
    %310 = vmatpush1.msra.mxu0 %v309
    %311 = vmatprep.subr.mxu0 0.0
    %v312 = vand.u32 %v42, 4294901760
    %v313 = vsub.f32 %v42, %v312
    %314 = vmatpush1.msra.mxu0 %v313
    %315 = vmatprep.subr.mxu0 0.0
    %316 = vmatpush2.msra.mxu0 0.0
    %317 = vmatprep.subr.mxu0 0.0
    %318 = vmatpush2.msra.mxu0 0.0
    %319 = vmatprep.subr.mxu0 0.0
    %320 = vmatpush2.msra.mxu0 0.0
    %321 = vmatprep.subr.mxu0 0.0
    %322 = vmatpush2.msra.mxu0 0.0
    %323 = vmatprep.subr.mxu0 0.0
    %324 = vmatpush2.msra.mxu0 0.0
    %325 = vmatprep.subr.mxu0 0.0
    %326 = vmatpush2.msra.mxu0 0.0
    %327 = vmatprep.subr.mxu0 0.0
    %328 = vmatpush2.msra.mxu0 0.0
    %329 = vmatprep.subr.mxu0 0.0
    %330 = vmatpush2.msra.mxu0 0.0
    %331 = vmatprep.subr.mxu0 0.0
    %332 = vmatpush2.msra.mxu0 0.0
    %333 = vmatprep.subr.mxu0 0.0
    %334 = vmatpush2.msra.mxu0 0.0
    %335 = vmatprep.subr.mxu0 0.0
    %336 = vmatpush2.msra.mxu0 0.0
    %337 = vmatprep.subr.mxu0 0.0
    %338 = vmatpush2.msra.mxu0 0.0
    %339 = vmatprep.subr.mxu0 0.0
    %340 = vmatpush2.msra.mxu0 0.0
    %341 = vmatprep.subr.mxu0 0.0
    %342 = vmatpush2.msra.mxu0 0.0
    %343 = vmatprep.subr.mxu0 0.0
    %344 = vmatpush2.msra.mxu0 0.0
    %345 = vmatprep.subr.mxu0 0.0
    %346 = vmatpush2.msra.mxu0 0.0
    %347 = vmatprep.mubr.f32.mxu0 0.0
    %v348 = vand.u32 %v52, 4294901760
    %v349 = vsub.f32 %v52, %v348
    %350 = vmatmul.mubr.f32.gmra.mxu0 %v349
    %v351 = vpop.f32.mrf.mxu0
    %v352 = vadd.f32 %v258, %v351
    %v353 = vpop.f32.mrf.mxu0
    %354 = vmatprep.mubr.f32.mxu0 0.0
    %v355 = vand.u32 %v55, 4294901760
    %v356 = vsub.f32 %v55, %v355
    %357 = vmatmul.mubr.f32.gmra.mxu0 %v356
    %v358 = vpop.f32.mrf.mxu0
    %v359 = vadd.f32 %v264, %v358
    %v360 = vpop.f32.mrf.mxu0
    %361 = vdwg.mxu0
    %362 = vmatprep.subr.mxu0 0.0
    %363 = vmatpush1.msra.mxu0 0.0
    %364 = vmatprep.subr.mxu0 0.0
    %365 = vmatpush1.msra.mxu0 0.0
    %366 = vmatprep.subr.mxu0 0.0
    %367 = vmatpush1.msra.mxu0 0.0
    %368 = vmatprep.subr.mxu0 0.0
    %369 = vmatpush1.msra.mxu0 0.0
    %370 = vmatprep.subr.mxu0 0.0
    %371 = vmatpush1.msra.mxu0 0.0
    %372 = vmatprep.subr.mxu0 0.0
    %373 = vmatpush1.msra.mxu0 0.0
    %374 = vmatprep.subr.mxu0 0.0
    %375 = vmatpush1.msra.mxu0 0.0
    %376 = vmatprep.subr.mxu0 0.0
    %377 = vmatpush1.msra.mxu0 0.0
    %378 = vmatprep.subr.mxu0 0.0
    %v379 = vand.u32 %v49, 4294901760
    %380 = vmatpush1.msra.mxu0 %v379
    %381 = vmatprep.subr.mxu0 0.0
    %v382 = vand.u32 %v48, 4294901760
    %383 = vmatpush1.msra.mxu0 %v382
    %384 = vmatprep.subr.mxu0 0.0
    %v385 = vand.u32 %v47, 4294901760
    %386 = vmatpush1.msra.mxu0 %v385
    %387 = vmatprep.subr.mxu0 0.0
    %v388 = vand.u32 %v46, 4294901760
    %389 = vmatpush1.msra.mxu0 %v388
    %390 = vmatprep.subr.mxu0 0.0
    %v391 = vand.u32 %v45, 4294901760
    %392 = vmatpush1.msra.mxu0 %v391
    %393 = vmatprep.subr.mxu0 0.0
    %v394 = vand.u32 %v44, 4294901760
    %395 = vmatpush1.msra.mxu0 %v394
    %396 = vmatprep.subr.mxu0 0.0
    %v397 = vand.u32 %v43, 4294901760
    %398 = vmatpush1.msra.mxu0 %v397
    %399 = vmatprep.subr.mxu0 0.0
    %v400 = vand.u32 %v42, 4294901760
    %401 = vmatpush1.msra.mxu0 %v400
    %402 = vmatprep.subr.mxu0 0.0
    %403 = vmatpush2.msra.mxu0 0.0
    %404 = vmatprep.subr.mxu0 0.0
    %405 = vmatpush2.msra.mxu0 0.0
    %406 = vmatprep.subr.mxu0 0.0
    %407 = vmatpush2.msra.mxu0 0.0
    %408 = vmatprep.subr.mxu0 0.0
    %409 = vmatpush2.msra.mxu0 0.0
    %410 = vmatprep.subr.mxu0 0.0
    %411 = vmatpush2.msra.mxu0 0.0
    %412 = vmatprep.subr.mxu0 0.0
    %413 = vmatpush2.msra.mxu0 0.0
    %414 = vmatprep.subr.mxu0 0.0
    %415 = vmatpush2.msra.mxu0 0.0
    %416 = vmatprep.subr.mxu0 0.0
    %417 = vmatpush2.msra.mxu0 0.0
    %418 = vmatprep.subr.mxu0 0.0
    %419 = vmatpush2.msra.mxu0 0.0
    %420 = vmatprep.subr.mxu0 0.0
    %421 = vmatpush2.msra.mxu0 0.0
    %422 = vmatprep.subr.mxu0 0.0
    %423 = vmatpush2.msra.mxu0 0.0
    %424 = vmatprep.subr.mxu0 0.0
    %425 = vmatpush2.msra.mxu0 0.0
    %426 = vmatprep.subr.mxu0 0.0
    %427 = vmatpush2.msra.mxu0 0.0
    %428 = vmatprep.subr.mxu0 0.0
    %429 = vmatpush2.msra.mxu0 0.0
    %430 = vmatprep.subr.mxu0 0.0
    %431 = vmatpush2.msra.mxu0 0.0
    %432 = vmatprep.subr.mxu0 0.0
    %433 = vmatpush2.msra.mxu0 0.0
    %434 = vmatprep.mubr.f32.mxu0 0.0
    %v435 = vand.u32 %v52, 4294901760
    %v436 = vsub.f32 %v52, %v435
    %v437 = vand.u32 %v436, 4294901760
    %438 = vmatmul.mubr.f32.gmra.mxu0 %v437
    %v439 = vpop.f32.mrf.mxu0
    %v440 = vadd.f32 %v352, %v439
    %v441 = vpop.f32.mrf.mxu0
    %442 = vmatprep.mubr.f32.mxu0 0.0
    %v443 = vand.u32 %v55, 4294901760
    %v444 = vsub.f32 %v55, %v443
    %v445 = vand.u32 %v444, 4294901760
    %446 = vmatmul.mubr.f32.gmra.mxu0 %v445
    %v447 = vpop.f32.mrf.mxu0
    %v448 = vadd.f32 %v359, %v447
    %v449 = vpop.f32.mrf.mxu0
    %450 = vdwg.mxu0
    %451 = vmatprep.subr.mxu0 0.0
    %452 = vmatpush1.msra.mxu0 0.0
    %453 = vmatprep.subr.mxu0 0.0
    %454 = vmatpush1.msra.mxu0 0.0
    %455 = vmatprep.subr.mxu0 0.0
    %456 = vmatpush1.msra.mxu0 0.0
    %457 = vmatprep.subr.mxu0 0.0
    %458 = vmatpush1.msra.mxu0 0.0
    %459 = vmatprep.subr.mxu0 0.0
    %460 = vmatpush1.msra.mxu0 0.0
    %461 = vmatprep.subr.mxu0 0.0
    %462 = vmatpush1.msra.mxu0 0.0
    %463 = vmatprep.subr.mxu0 0.0
    %464 = vmatpush1.msra.mxu0 0.0
    %465 = vmatprep.subr.mxu0 0.0
    %466 = vmatpush1.msra.mxu0 0.0
    %467 = vmatprep.subr.mxu0 0.0
    %v468 = vand.u32 %v49, 4294901760
    %v469 = vsub.f32 %v49, %v468
    %v470 = vand.u32 %v469, 4294901760
    %471 = vmatpush1.msra.mxu0 %v470
    %472 = vmatprep.subr.mxu0 0.0
    %v473 = vand.u32 %v48, 4294901760
    %v474 = vsub.f32 %v48, %v473
    %v475 = vand.u32 %v474, 4294901760
    %476 = vmatpush1.msra.mxu0 %v475
    %477 = vmatprep.subr.mxu0 0.0
    %v478 = vand.u32 %v47, 4294901760
    %v479 = vsub.f32 %v47, %v478
    %v480 = vand.u32 %v479, 4294901760
    %481 = vmatpush1.msra.mxu0 %v480
    %482 = vmatprep.subr.mxu0 0.0
    %v483 = vand.u32 %v46, 4294901760
    %v484 = vsub.f32 %v46, %v483
    %v485 = vand.u32 %v484, 4294901760
    %486 = vmatpush1.msra.mxu0 %v485
    %487 = vmatprep.subr.mxu0 0.0
    %v488 = vand.u32 %v45, 4294901760
    %v489 = vsub.f32 %v45, %v488
    %v490 = vand.u32 %v489, 4294901760
    %491 = vmatpush1.msra.mxu0 %v490
    %492 = vmatprep.subr.mxu0 0.0
    %v493 = vand.u32 %v44, 4294901760
    %v494 = vsub.f32 %v44, %v493
    %v495 = vand.u32 %v494, 4294901760
    %496 = vmatpush1.msra.mxu0 %v495
    %497 = vmatprep.subr.mxu0 0.0
    %v498 = vand.u32 %v43, 4294901760
    %v499 = vsub.f32 %v43, %v498
    %v500 = vand.u32 %v499, 4294901760
    %501 = vmatpush1.msra.mxu0 %v500
    %502 = vmatprep.subr.mxu0 0.0
    %v503 = vand.u32 %v42, 4294901760
    %v504 = vsub.f32 %v42, %v503
    %v505 = vand.u32 %v504, 4294901760
    %506 = vmatpush1.msra.mxu0 %v505
    %507 = vmatprep.subr.mxu0 0.0
    %508 = vmatpush2.msra.mxu0 0.0
    %509 = vmatprep.subr.mxu0 0.0
    %510 = vmatpush2.msra.mxu0 0.0
    %511 = vmatprep.subr.mxu0 0.0
    %512 = vmatpush2.msra.mxu0 0.0
    %513 = vmatprep.subr.mxu0 0.0
    %514 = vmatpush2.msra.mxu0 0.0
    %515 = vmatprep.subr.mxu0 0.0
    %516 = vmatpush2.msra.mxu0 0.0
    %517 = vmatprep.subr.mxu0 0.0
    %518 = vmatpush2.msra.mxu0 0.0
    %519 = vmatprep.subr.mxu0 0.0
    %520 = vmatpush2.msra.mxu0 0.0
    %521 = vmatprep.subr.mxu0 0.0
    %522 = vmatpush2.msra.mxu0 0.0
    %523 = vmatprep.subr.mxu0 0.0
    %524 = vmatpush2.msra.mxu0 0.0
    %525 = vmatprep.subr.mxu0 0.0
    %526 = vmatpush2.msra.mxu0 0.0
    %527 = vmatprep.subr.mxu0 0.0
    %528 = vmatpush2.msra.mxu0 0.0
    %529 = vmatprep.subr.mxu0 0.0
    %530 = vmatpush2.msra.mxu0 0.0
    %531 = vmatprep.subr.mxu0 0.0
    %532 = vmatpush2.msra.mxu0 0.0
    %533 = vmatprep.subr.mxu0 0.0
    %534 = vmatpush2.msra.mxu0 0.0
    %535 = vmatprep.subr.mxu0 0.0
    %536 = vmatpush2.msra.mxu0 0.0
    %537 = vmatprep.subr.mxu0 0.0
    %538 = vmatpush2.msra.mxu0 0.0
    %539 = vmatprep.mubr.f32.mxu0 0.0
    %v540 = vand.u32 %v52, 4294901760
    %541 = vmatmul.mubr.f32.gmra.mxu0 %v540
    %v542 = vpop.f32.mrf.mxu0
    %v543 = vadd.f32 %v440, %v542
    %v544 = vpop.f32.mrf.mxu0
    %545 = vmatprep.mubr.f32.mxu0 0.0
    %v546 = vand.u32 %v55, 4294901760
    %547 = vmatmul.mubr.f32.gmra.mxu0 %v546
    %v548 = vpop.f32.mrf.mxu0
    %v549 = vadd.f32 %v448, %v548
    %v550 = vpop.f32.mrf.mxu0
    %551 = vdwg.mxu0
    %552 = vmatprep.subr.mxu0 0.0
    %553 = vmatpush1.msra.mxu0 0.0
    %554 = vmatprep.subr.mxu0 0.0
    %555 = vmatpush1.msra.mxu0 0.0
    %556 = vmatprep.subr.mxu0 0.0
    %557 = vmatpush1.msra.mxu0 0.0
    %558 = vmatprep.subr.mxu0 0.0
    %559 = vmatpush1.msra.mxu0 0.0
    %560 = vmatprep.subr.mxu0 0.0
    %561 = vmatpush1.msra.mxu0 0.0
    %562 = vmatprep.subr.mxu0 0.0
    %563 = vmatpush1.msra.mxu0 0.0
    %564 = vmatprep.subr.mxu0 0.0
    %565 = vmatpush1.msra.mxu0 0.0
    %566 = vmatprep.subr.mxu0 0.0
    %567 = vmatpush1.msra.mxu0 0.0
    %568 = vmatprep.subr.mxu0 0.0
    %v569 = vand.u32 %v49, 4294901760
    %570 = vmatpush1.msra.mxu0 %v569
    %571 = vmatprep.subr.mxu0 0.0
    %v572 = vand.u32 %v48, 4294901760
    %573 = vmatpush1.msra.mxu0 %v572
    %574 = vmatprep.subr.mxu0 0.0
    %v575 = vand.u32 %v47, 4294901760
    %576 = vmatpush1.msra.mxu0 %v575
    %577 = vmatprep.subr.mxu0 0.0
    %v578 = vand.u32 %v46, 4294901760
    %579 = vmatpush1.msra.mxu0 %v578
    %580 = vmatprep.subr.mxu0 0.0
    %v581 = vand.u32 %v45, 4294901760
    %582 = vmatpush1.msra.mxu0 %v581
    %583 = vmatprep.subr.mxu0 0.0
    %v584 = vand.u32 %v44, 4294901760
    %585 = vmatpush1.msra.mxu0 %v584
    %586 = vmatprep.subr.mxu0 0.0
    %v587 = vand.u32 %v43, 4294901760
    %588 = vmatpush1.msra.mxu0 %v587
    %589 = vmatprep.subr.mxu0 0.0
    %v590 = vand.u32 %v42, 4294901760
    %591 = vmatpush1.msra.mxu0 %v590
    %592 = vmatprep.subr.mxu0 0.0
    %593 = vmatpush2.msra.mxu0 0.0
    %594 = vmatprep.subr.mxu0 0.0
    %595 = vmatpush2.msra.mxu0 0.0
    %596 = vmatprep.subr.mxu0 0.0
    %597 = vmatpush2.msra.mxu0 0.0
    %598 = vmatprep.subr.mxu0 0.0
    %599 = vmatpush2.msra.mxu0 0.0
    %600 = vmatprep.subr.mxu0 0.0
    %601 = vmatpush2.msra.mxu0 0.0
    %602 = vmatprep.subr.mxu0 0.0
    %603 = vmatpush2.msra.mxu0 0.0
    %604 = vmatprep.subr.mxu0 0.0
    %605 = vmatpush2.msra.mxu0 0.0
    %606 = vmatprep.subr.mxu0 0.0
    %607 = vmatpush2.msra.mxu0 0.0
    %608 = vmatprep.subr.mxu0 0.0
    %609 = vmatpush2.msra.mxu0 0.0
    %610 = vmatprep.subr.mxu0 0.0
    %611 = vmatpush2.msra.mxu0 0.0
    %612 = vmatprep.subr.mxu0 0.0
    %613 = vmatpush2.msra.mxu0 0.0
    %614 = vmatprep.subr.mxu0 0.0
    %615 = vmatpush2.msra.mxu0 0.0
    %616 = vmatprep.subr.mxu0 0.0
    %617 = vmatpush2.msra.mxu0 0.0
    %618 = vmatprep.subr.mxu0 0.0
    %619 = vmatpush2.msra.mxu0 0.0
    %620 = vmatprep.subr.mxu0 0.0
    %621 = vmatpush2.msra.mxu0 0.0
    %622 = vmatprep.subr.mxu0 0.0
    %623 = vmatpush2.msra.mxu0 0.0
    %624 = vmatprep.mubr.f32.mxu0 0.0
    %v625 = vand.u32 %v52, 4294901760
    %626 = vmatmul.mubr.f32.gmra.mxu0 %v625
    %v627 = vpop.f32.mrf.mxu0
    %v628 = vadd.f32 %v543, %v627
    %v629 = vpop.f32.mrf.mxu0
    %630 = vmatprep.mubr.f32.mxu0 0.0
    %v631 = vand.u32 %v55, 4294901760
    %632 = vmatmul.mubr.f32.gmra.mxu0 %v631
    %v633 = vpop.f32.mrf.mxu0
    %v634 = vadd.f32 %v549, %v633
    %v635 = vpop.f32.mrf.mxu0
    %636 = vdwg.mxu0
    %v637 = vmul.f32 %v628, 11.313708
    %v638 = vmul.f32 %v634, 11.313708
    %639 = vst [vmem:[#allocation5] sm:$0xff] %v637
    %640 = vst [vmem:[#allocation5 + $0x8] sm:$0xff] %v638
    // Predicated region
    $region14: #{tpu_custom_call.1} parent=1 // pred_check
      _
    $region15: #{tpu_custom_call.1} parent=1 // pred_check_branch
      %642 = sbr.rel (0) target = $region17
    $region16: #{tpu_custom_call.1} parent=1 // pred_region
      %s644 = ssub.s32 256, 256
      %645 = vsyncadd [#allocation4], %s644
      %s646 = sshll.u32 [#allocation5], 4
      %s647 = int_to_ptr.vmem [resolvable:$true] %s646
      %652 = dma.vmem_to_hbm [thread:$0]  %s647, 256, %s2, [#allocation4], 128, 128, 8
    $region17: #{tpu_custom_call.1} parent=1 // pred_fallthru
      _
    // Predicated region
    $region18: #{tpu_custom_call.1} parent=1 // pred_check
      _
    $region19: #{tpu_custom_call.1} parent=1 // pred_check_branch
      %654 = sbr.rel (0) target = $region21
    $region20: #{tpu_custom_call.1} parent=1 // pred_region
      %655 = dma.done [#allocation4], 256
    $region21: #{tpu_custom_call.1} parent=1 // pred_fallthru
      _
    %656 = vsyncpa [#allocation3], 1
    %657 = vsyncpa [#allocation4], 1

</llo_original>
